<compile_context>
chip_gen: v5e
topology: v5e:2x2
jax: 0.10.0
libtpu: 0.0.40
codegen_flags: <defaults>
</compile_context>

<pallas_src>
import functools

import jax
import jax.numpy as jnp
from jax.experimental import pallas as pl
from jax.experimental.pallas import tpu as pltpu

LANE = 128


def _round_up(n, m):
    return (n + m - 1) // m * m


def mlp_cell_kernel(x_ref, w1_ref, b1_ref, w2_ref, b2_ref, w3_ref, b3_ref, o_ref):
    x = x_ref[...]                                                     # (tile_b, 128) bf16

    # Layer 1: Linear + ReLU  (bf16 MXU matmul, f32 accumulate, f32 epilogue)
    h1 = jnp.dot(x, w1_ref[...], preferred_element_type=jnp.float32) + b1_ref[...]
    h1 = jnp.maximum(h1, 0.0).astype(jnp.bfloat16)

    # Layer 2: Linear + ReLU
    h2 = jnp.dot(h1, w2_ref[...], preferred_element_type=jnp.float32) + b2_ref[...]
    h2 = jnp.maximum(h2, 0.0).astype(jnp.bfloat16)

    # Layer 3: Linear + Sigmoid (EUP)
    h3 = jnp.dot(h2, w3_ref[...], preferred_element_type=jnp.float32) + b3_ref[...]
    o_ref[...] = jax.nn.sigmoid(h3).astype(o_ref.dtype)


def _prep_params(params):
    """Zero-pad every feature dim to a multiple of 128 lanes; weights -> bf16, biases -> f32."""
    w1, b1, w2, b2, w3, b3 = params

    def pad_w(w):
        fi, fo = w.shape
        return jnp.pad(w, ((0, _round_up(fi, LANE) - fi),
                           (0, _round_up(fo, LANE) - fo))).astype(jnp.bfloat16)

    def pad_b(b):
        fo = b.shape[1]
        return jnp.pad(b, ((0, 0), (0, _round_up(fo, LANE) - fo))).astype(jnp.float32)

    return pad_w(w1), pad_b(b1), pad_w(w2), pad_b(b2), pad_w(w3), pad_b(b3)


@functools.partial(jax.jit, static_argnames=("tile_b",))
def mlp_cell_forward(x, params, *, tile_b=256):
    B, in_dim = x.shape
    out_dim = params[5].shape[1]

    w1p, b1p, w2p, b2p, w3p, b3p = _prep_params(params)
    in_pad = w1p.shape[0]
    out_pad = w3p.shape[1]

    # Row tiling: keep double-buffered (tile_b, 128) bf16 x / (tile_b, 128) f32 out
    # tiles — ~0.2 MiB per buffer at tile_b=256, trivially within the VMEM budget
    # on all generations (incl. v7x's smaller 64 MiB).  Shrink the tile for tiny B.
    tile_b = min(tile_b, _round_up(B, 8))
    B_pad = _round_up(B, tile_b)

    x_p = jnp.pad(x.astype(jnp.bfloat16),
                  ((0, B_pad - B), (0, in_pad - in_dim)))

    grid = (B_pad // tile_b,)

    # NOTE: on v5e, pipeline_mode=pl.Buffered(3) on the x BlockSpec can be added
    # if the HBM fetch stays exposed after batch tiling.
    out = pl.pallas_call(
        mlp_cell_kernel,
        out_shape=jax.ShapeDtypeStruct((B_pad, out_pad), jnp.float32),
        grid=grid,
        in_specs=[
            pl.BlockSpec((tile_b, in_pad), lambda i: (i, 0)),   # x: streamed per row-tile
            pl.BlockSpec(w1p.shape, lambda i: (0, 0)),          # weights/biases: VMEM-resident
            pl.BlockSpec(b1p.shape, lambda i: (0, 0)),
            pl.BlockSpec(w2p.shape, lambda i: (0, 0)),
            pl.BlockSpec(b2p.shape, lambda i: (0, 0)),
            pl.BlockSpec(w3p.shape, lambda i: (0, 0)),
            pl.BlockSpec(b3p.shape, lambda i: (0, 0)),
        ],
        out_specs=pl.BlockSpec((tile_b, out_pad), lambda i: (i, 0)),
        compiler_params=pltpu.CompilerParams(
            dimension_semantics=("parallel",)),
    )(x_p, w1p, b1p, w2p, b2p, w3p, b3p)

    return out[:B, :out_dim]


def init_params(key, in_dim=100, hid_dim=32, out_dim=2):
    """Deterministic init mimicking PyTorch nn.Linear default (U[-1/sqrt(fan_in), 1/sqrt(fan_in)])."""
    dims = [(in_dim, 2 * hid_dim), (2 * hid_dim, hid_dim), (hid_dim, out_dim)]
    params = []
    for (fan_in, fan_out) in dims:
        key, kw, kb = jax.random.split(key, 3)
        bound = 1.0 / jnp.sqrt(jnp.float32(fan_in))
        w = jax.random.uniform(kw, (fan_in, fan_out), jnp.float32, -bound, bound)
        b = jax.random.uniform(kb, (1, fan_out), jnp.float32, -bound, bound)
        params.extend([w, b])
    return tuple(params)


def reference_forward(x, params):
    w1, b1, w2, b2, w3, b3 = params
    h = jnp.maximum(x @ w1 + b1, 0.0)
    h = jnp.maximum(h @ w2 + b2, 0.0)
    return jax.nn.sigmoid(h @ w3 + b3)


if __name__ == "__main__":
    key = jax.random.PRNGKey(0)
    key, kx = jax.random.split(key)

    B, in_dim, hid_dim, out_dim = 8, 100, 32, 2
    x = jax.random.normal(kx, (B, in_dim), dtype=jnp.float32)
    params = init_params(key, in_dim, hid_dim, out_dim)

    out = mlp_cell_forward(x, params)
    out = jax.block_until_ready(out)

    ref = reference_forward(x, params)
    assert out.shape == (B, out_dim)
    # bf16 weight/activation streaming vs pure-f32 reference -> looser tolerance.
    assert jnp.allclose(out, ref, atol=2e-2, rtol=2e-2), "mismatch vs reference"

    print("KERNEL_OK")
</pallas_src>

<mosaic_0001>
module attributes {stable_mosaic.version = 11 : i64} {
  func.func @mlp_cell_kernel(%arg0: i32, %arg1: memref<8x128xbf16, #tpu.memory_space<vmem>>, %arg2: memref<128x128xbf16, #tpu.memory_space<vmem>>, %arg3: memref<1x128xf32, #tpu.memory_space<vmem>>, %arg4: memref<128x128xbf16, #tpu.memory_space<vmem>>, %arg5: memref<1x128xf32, #tpu.memory_space<vmem>>, %arg6: memref<128x128xbf16, #tpu.memory_space<vmem>>, %arg7: memref<1x128xf32, #tpu.memory_space<vmem>>, %arg8: memref<8x128xf32, #tpu.memory_space<vmem>>) attributes {dimension_semantics = [#tpu.dimension_semantics<parallel>], iteration_bounds = array<i64: 1>, scalar_prefetch = 0 : i64, scratch_operands = 0 : i64, tpu.core_type = #tpu.core_type<tc>, window_params = [{transform_indices = @transform_0, window_bounds = array<i64: 8, 128>}, {pipeline_mode = #tpu.pipeline_mode<synchronous>, transform_indices = @transform_1, window_bounds = array<i64: 128, 128>}, {pipeline_mode = #tpu.pipeline_mode<synchronous>, transform_indices = @transform_2, window_bounds = array<i64: 1, 128>}, {pipeline_mode = #tpu.pipeline_mode<synchronous>, transform_indices = @transform_3, window_bounds = array<i64: 128, 128>}, {pipeline_mode = #tpu.pipeline_mode<synchronous>, transform_indices = @transform_4, window_bounds = array<i64: 1, 128>}, {pipeline_mode = #tpu.pipeline_mode<synchronous>, transform_indices = @transform_5, window_bounds = array<i64: 128, 128>}, {pipeline_mode = #tpu.pipeline_mode<synchronous>, transform_indices = @transform_6, window_bounds = array<i64: 1, 128>}, {transform_indices = @transform_7, window_bounds = array<i64: 8, 128>}]} {
    %c0 = arith.constant 0 : index
    %c0_0 = arith.constant 0 : index
    %0 = vector.load %arg1[%c0, %c0_0] : memref<8x128xbf16, #tpu.memory_space<vmem>>, vector<8x128xbf16>
    %c0_1 = arith.constant 0 : index
    %c0_2 = arith.constant 0 : index
    %1 = vector.load %arg2[%c0_1, %c0_2] : memref<128x128xbf16, #tpu.memory_space<vmem>>, vector<128x128xbf16>
    %cst = arith.constant dense<0.000000e+00> : vector<8x128xf32>
    %2 = tpu.matmul %0, %1, %cst {dimension_numbers = #tpu.dot_dimension_numbers<[1], [0], [0], [1], [0, 0, 1, 1], [], []>} : vector<8x128xbf16>, vector<128x128xbf16>, vector<8x128xf32> -> vector<8x128xf32>
    %c0_3 = arith.constant 0 : index
    %c0_4 = arith.constant 0 : index
    %3 = vector.load %arg3[%c0_3, %c0_4] : memref<1x128xf32, #tpu.memory_space<vmem>>, vector<1x128xf32>
    %4 = vector.broadcast %3 : vector<1x128xf32> to vector<8x128xf32>
    %5 = arith.addf %2, %4 : vector<8x128xf32>
    %cst_5 = arith.constant 0.000000e+00 : f32
    %6 = vector.broadcast %cst_5 : f32 to vector<8x128xf32>
    %7 = arith.maximumf %5, %6 : vector<8x128xf32>
    %8 = arith.truncf %7 : vector<8x128xf32> to vector<8x128xbf16>
    %c0_6 = arith.constant 0 : index
    %c0_7 = arith.constant 0 : index
    %9 = vector.load %arg4[%c0_6, %c0_7] : memref<128x128xbf16, #tpu.memory_space<vmem>>, vector<128x128xbf16>
    %cst_8 = arith.constant dense<0.000000e+00> : vector<8x128xf32>
    %10 = tpu.matmul %8, %9, %cst_8 {dimension_numbers = #tpu.dot_dimension_numbers<[1], [0], [0], [1], [0, 0, 1, 1], [], []>} : vector<8x128xbf16>, vector<128x128xbf16>, vector<8x128xf32> -> vector<8x128xf32>
    %c0_9 = arith.constant 0 : index
    %c0_10 = arith.constant 0 : index
    %11 = vector.load %arg5[%c0_9, %c0_10] : memref<1x128xf32, #tpu.memory_space<vmem>>, vector<1x128xf32>
    %12 = vector.broadcast %11 : vector<1x128xf32> to vector<8x128xf32>
    %13 = arith.addf %10, %12 : vector<8x128xf32>
    %cst_11 = arith.constant 0.000000e+00 : f32
    %14 = vector.broadcast %cst_11 : f32 to vector<8x128xf32>
    %15 = arith.maximumf %13, %14 : vector<8x128xf32>
    %16 = arith.truncf %15 : vector<8x128xf32> to vector<8x128xbf16>
    %c0_12 = arith.constant 0 : index
    %c0_13 = arith.constant 0 : index
    %17 = vector.load %arg6[%c0_12, %c0_13] : memref<128x128xbf16, #tpu.memory_space<vmem>>, vector<128x128xbf16>
    %cst_14 = arith.constant dense<0.000000e+00> : vector<8x128xf32>
    %18 = tpu.matmul %16, %17, %cst_14 {dimension_numbers = #tpu.dot_dimension_numbers<[1], [0], [0], [1], [0, 0, 1, 1], [], []>} : vector<8x128xbf16>, vector<128x128xbf16>, vector<8x128xf32> -> vector<8x128xf32>
    %c0_15 = arith.constant 0 : index
    %c0_16 = arith.constant 0 : index
    %19 = vector.load %arg7[%c0_15, %c0_16] : memref<1x128xf32, #tpu.memory_space<vmem>>, vector<1x128xf32>
    %20 = vector.broadcast %19 : vector<1x128xf32> to vector<8x128xf32>
    %21 = arith.addf %18, %20 : vector<8x128xf32>
    %22 = arith.negf %21 : vector<8x128xf32>
    %23 = math.exp %22 : vector<8x128xf32>
    %cst_17 = arith.constant 1.000000e+00 : f32
    %24 = vector.broadcast %cst_17 : f32 to vector<8x128xf32>
    %25 = arith.addf %24, %23 : vector<8x128xf32>
    %26 = arith.divf %24, %25 : vector<8x128xf32>
    %c0_18 = arith.constant 0 : index
    %c0_19 = arith.constant 0 : index
    %27 = vector.load %arg8[%c0_18, %c0_19] : memref<8x128xf32, #tpu.memory_space<vmem>>, vector<8x128xf32>
    tpu.vector_store %arg8[%c0_18, %c0_19], %26 {strides = array<i32>} : memref<8x128xf32, #tpu.memory_space<vmem>>, vector<8x128xf32>,
    return
  }
  func.func @transform_0(%arg0: i32) -> (i32, i32) {
    %c0_i32 = arith.constant 0 : i32
    %c0_i32_0 = arith.constant 0 : i32
    return %arg0, %c0_i32 : i32, i32
  }
  func.func @transform_1(%arg0: i32) -> (i32, i32) {
    %c0_i32 = arith.constant 0 : i32
    %c0_i32_0 = arith.constant 0 : i32
    %c0_i32_1 = arith.constant 0 : i32
    return %c0_i32, %c0_i32_0 : i32, i32
  }
  func.func @transform_2(%arg0: i32) -> (i32, i32) {
    %c0_i32 = arith.constant 0 : i32
    %c0_i32_0 = arith.constant 0 : i32
    %c0_i32_1 = arith.constant 0 : i32
    return %c0_i32, %c0_i32_0 : i32, i32
  }
  func.func @transform_3(%arg0: i32) -> (i32, i32) {
    %c0_i32 = arith.constant 0 : i32
    %c0_i32_0 = arith.constant 0 : i32
    %c0_i32_1 = arith.constant 0 : i32
    return %c0_i32, %c0_i32_0 : i32, i32
  }
  func.func @transform_4(%arg0: i32) -> (i32, i32) {
    %c0_i32 = arith.constant 0 : i32
    %c0_i32_0 = arith.constant 0 : i32
    %c0_i32_1 = arith.constant 0 : i32
    return %c0_i32, %c0_i32_0 : i32, i32
  }
  func.func @transform_5(%arg0: i32) -> (i32, i32) {
    %c0_i32 = arith.constant 0 : i32
    %c0_i32_0 = arith.constant 0 : i32
    %c0_i32_1 = arith.constant 0 : i32
    return %c0_i32, %c0_i32_0 : i32, i32
  }
  func.func @transform_6(%arg0: i32) -> (i32, i32) {
    %c0_i32 = arith.constant 0 : i32
    %c0_i32_0 = arith.constant 0 : i32
    %c0_i32_1 = arith.constant 0 : i32
    return %c0_i32, %c0_i32_0 : i32, i32
  }
  func.func @transform_7(%arg0: i32) -> (i32, i32) {
    %c0_i32 = arith.constant 0 : i32
    %c0_i32_0 = arith.constant 0 : i32
    return %arg0, %c0_i32 : i32, i32
  }
}

</mosaic_0001>

<llo_original>
// kernel: mlp_cell_forward.1
$region0: #{mlp_cell_forward.1}
  #allocation0 [shape = 'u32[]', space=smem, size = 0x4, offset = 0x4, fixed_abs, tag = 'smem constant byte address 0x4 - core index']
  #allocation1 [shape = 'u32[72,128]{1,0:T(1,128)}', space=vmem, size = 0x9000, scoped, tag = 'internal scratch']
  %s0 = inlined_call_operand.vmem [shape: bf16[8,128], index: 0, kind: input, shape index: {}]
  %s1 = inlined_call_operand.vmem [shape: bf16[128,128], index: 1, kind: input, shape index: {}]
  %s2 = inlined_call_operand.vmem [shape: f32[1,128], index: 2, kind: input, shape index: {}]
  %s3 = inlined_call_operand.vmem [shape: bf16[128,128], index: 3, kind: input, shape index: {}]
  %s4 = inlined_call_operand.vmem [shape: f32[1,128], index: 4, kind: input, shape index: {}]
  %s5 = inlined_call_operand.vmem [shape: bf16[128,128], index: 5, kind: input, shape index: {}]
  %s6 = inlined_call_operand.vmem [shape: f32[1,128], index: 6, kind: input, shape index: {}]
  %s7 = inlined_call_operand.vmem [shape: f32[8,128], index: 7, kind: output, shape index: {}]
  %s8 = sld [smem:[#allocation0]]
  $region38: #{mlp_cell_forward.1} parent=0
    _
  %s10 = ssub.s32 1, %s8
  %s11 = scalar_select 0, %s10, %s8
  // Predicated region
  $region2: #{mlp_cell_forward.1} parent=0 // pred_check
    _
  $region3: #{mlp_cell_forward.1} parent=0 // pred_check_branch
    %13 = sbr.rel (0) target = $region5
  $region4: #{mlp_cell_forward.1} parent=0 // pred_region
    _
  $region5: #{mlp_cell_forward.1} parent=0 // pred_fallthru
    _
  // Predicated region
  $region6: #{mlp_cell_forward.1} parent=0 // pred_check
    _
  $region7: #{mlp_cell_forward.1} parent=0 // pred_check_branch
    %15 = sbr.rel (0) target = $region9
  $region8: #{mlp_cell_forward.1} parent=0 // pred_region
    _
  $region9: #{mlp_cell_forward.1} parent=0 // pred_fallthru
    _
  // Predicated region
  $region10: #{mlp_cell_forward.1} parent=0 // pred_check
    _
  $region11: #{mlp_cell_forward.1} parent=0 // pred_check_branch
    %17 = sbr.rel (0) target = $region13
  $region12: #{mlp_cell_forward.1} parent=0 // pred_region
    _
  $region13: #{mlp_cell_forward.1} parent=0 // pred_fallthru
    _
  // Predicated region
  $region14: #{mlp_cell_forward.1} parent=0 // pred_check
    _
  $region15: #{mlp_cell_forward.1} parent=0 // pred_check_branch
    %19 = sbr.rel (0) target = $region17
  $region16: #{mlp_cell_forward.1} parent=0 // pred_region
    _
  $region17: #{mlp_cell_forward.1} parent=0 // pred_fallthru
    _
  // Predicated region
  $region18: #{mlp_cell_forward.1} parent=0 // pred_check
    _
  $region19: #{mlp_cell_forward.1} parent=0 // pred_check_branch
    %21 = sbr.rel (0) target = $region21
  $region20: #{mlp_cell_forward.1} parent=0 // pred_region
    _
  $region21: #{mlp_cell_forward.1} parent=0 // pred_fallthru
    _
  // Predicated region
  $region22: #{mlp_cell_forward.1} parent=0 // pred_check
    _
  $region23: #{mlp_cell_forward.1} parent=0 // pred_check_branch
    %23 = sbr.rel (0) target = $region25
  $region24: #{mlp_cell_forward.1} parent=0 // pred_region
    _
  $region25: #{mlp_cell_forward.1} parent=0 // pred_fallthru
    _
  // Predicated region
  $region26: #{mlp_cell_forward.1} parent=0 // pred_check
    _
  $region27: #{mlp_cell_forward.1} parent=0 // pred_check_branch
    %25 = sbr.rel (0) target = $region29
  $region28: #{mlp_cell_forward.1} parent=0 // pred_region
    _
  $region29: #{mlp_cell_forward.1} parent=0 // pred_fallthru
    _
  %v26 = vld [vmem:[%s0] sm:$0xf]
  %v27 = vld [vmem:[%s1] sm:$0xf]
  %v28 = vld [vmem:[%s1 + $0x4] sm:$0xf]
  %v29 = vld [vmem:[%s1 + $0x8] sm:$0xf]
  %v30 = vld [vmem:[%s1 + $0xc] sm:$0xf]
  %v31 = vld [vmem:[%s1 + $0x10] sm:$0xf]
  %v32 = vld [vmem:[%s1 + $0x14] sm:$0xf]
  %v33 = vld [vmem:[%s1 + $0x18] sm:$0xf]
  %v34 = vld [vmem:[%s1 + $0x1c] sm:$0xf]
  %v35 = vld [vmem:[%s1 + $0x20] sm:$0xf]
  %v36 = vld [vmem:[%s1 + $0x24] sm:$0xf]
  %v37 = vld [vmem:[%s1 + $0x28] sm:$0xf]
  %v38 = vld [vmem:[%s1 + $0x2c] sm:$0xf]
  %v39 = vld [vmem:[%s1 + $0x30] sm:$0xf]
  %v40 = vld [vmem:[%s1 + $0x34] sm:$0xf]
  %v41 = vld [vmem:[%s1 + $0x38] sm:$0xf]
  %v42 = vld [vmem:[%s1 + $0x3c] sm:$0xf]
  %v43 = vld [vmem:[%s2] sm:$0x1]
  %v45 = vperm.slane %v43, 0
  %v63 = vunpack.c.l.b16 %v27
  %v64 = vunpack.c.l.b16 %v28
  %v65 = vunpack.c.l.b16 %v29
  %v66 = vunpack.c.l.b16 %v30
  %v67 = vunpack.c.l.b16 %v31
  %v68 = vunpack.c.l.b16 %v32
  %v69 = vunpack.c.l.b16 %v33
  %v70 = vunpack.c.l.b16 %v34
  %v71 = vunpack.c.l.b16 %v35
  %v72 = vunpack.c.l.b16 %v36
  %v73 = vunpack.c.l.b16 %v37
  %v74 = vunpack.c.l.b16 %v38
  %v75 = vunpack.c.l.b16 %v39
  %v76 = vunpack.c.l.b16 %v40
  %v77 = vunpack.c.l.b16 %v41
  %v78 = vunpack.c.l.b16 %v42
  %v79 = vpack.c.b16 %v64, %v63
  %v80 = vpack.c.b16 %v66, %v65
  %v81 = vpack.c.b16 %v68, %v67
  %v82 = vpack.c.b16 %v70, %v69
  %v83 = vpack.c.b16 %v72, %v71
  %v84 = vpack.c.b16 %v74, %v73
  %v85 = vpack.c.b16 %v76, %v75
  %v86 = vpack.c.b16 %v78, %v77
  %95 = vmatpush.bf16.msra.mxu0 %v86
  %96 = vmatpush.bf16.msra.mxu0 %v85
  %97 = vmatpush.bf16.msra.mxu0 %v84
  %98 = vmatpush.bf16.msra.mxu0 %v83
  %99 = vmatpush.bf16.msra.mxu0 %v82
  %100 = vmatpush.bf16.msra.mxu0 %v81
  %101 = vmatpush.bf16.msra.mxu0 %v80
  %102 = vmatpush.bf16.msra.mxu0 %v79
  %103 = vmatmul.bf16.gmra.mxu0 %v26
  %v104 = vpop.f32.mrf.mxu0
  %v105 = vadd.f32 %v45, %v104
  %v106 = vpop.f32.mrf.mxu0
  %107 = vdwg.mxu0
  %v108 = vmax.f32 %v105, 0.0
  %v109 = vpack.c.bf16 %v108, %v108
  %v110 = vld [vmem:[%s3] sm:$0xf]
  %v111 = vld [vmem:[%s3 + $0x4] sm:$0xf]
  %v112 = vld [vmem:[%s3 + $0x8] sm:$0xf]
  %v113 = vld [vmem:[%s3 + $0xc] sm:$0xf]
  %v114 = vld [vmem:[%s3 + $0x10] sm:$0xf]
  %v115 = vld [vmem:[%s3 + $0x14] sm:$0xf]
  %v116 = vld [vmem:[%s3 + $0x18] sm:$0xf]
  %v117 = vld [vmem:[%s3 + $0x1c] sm:$0xf]
  %v118 = vld [vmem:[%s3 + $0x20] sm:$0xf]
  %v119 = vld [vmem:[%s3 + $0x24] sm:$0xf]
  %v120 = vld [vmem:[%s3 + $0x28] sm:$0xf]
  %v121 = vld [vmem:[%s3 + $0x2c] sm:$0xf]
  %v122 = vld [vmem:[%s3 + $0x30] sm:$0xf]
  %v123 = vld [vmem:[%s3 + $0x34] sm:$0xf]
  %v124 = vld [vmem:[%s3 + $0x38] sm:$0xf]
  %v125 = vld [vmem:[%s3 + $0x3c] sm:$0xf]
  %v126 = vld [vmem:[%s4] sm:$0x1]
  %v128 = vperm.slane %v126, 0
  %v146 = vunpack.c.l.b16 %v110
  %v147 = vunpack.c.l.b16 %v111
  %v148 = vunpack.c.l.b16 %v112
  %v149 = vunpack.c.l.b16 %v113
  %v150 = vunpack.c.l.b16 %v114
  %v151 = vunpack.c.l.b16 %v115
  %v152 = vunpack.c.l.b16 %v116
  %v153 = vunpack.c.l.b16 %v117
  %v154 = vunpack.c.l.b16 %v118
  %v155 = vunpack.c.l.b16 %v119
  %v156 = vunpack.c.l.b16 %v120
  %v157 = vunpack.c.l.b16 %v121
  %v158 = vunpack.c.l.b16 %v122
  %v159 = vunpack.c.l.b16 %v123
  %v160 = vunpack.c.l.b16 %v124
  %v161 = vunpack.c.l.b16 %v125
  %v162 = vpack.c.b16 %v147, %v146
  %v163 = vpack.c.b16 %v149, %v148
  %v164 = vpack.c.b16 %v151, %v150
  %v165 = vpack.c.b16 %v153, %v152
  %v166 = vpack.c.b16 %v155, %v154
  %v167 = vpack.c.b16 %v157, %v156
  %v168 = vpack.c.b16 %v159, %v158
  %v169 = vpack.c.b16 %v161, %v160
  %178 = vmatpush.bf16.msra.mxu0 %v169
  %179 = vmatpush.bf16.msra.mxu0 %v168
  %180 = vmatpush.bf16.msra.mxu0 %v167
  %181 = vmatpush.bf16.msra.mxu0 %v166
  %182 = vmatpush.bf16.msra.mxu0 %v165
  %183 = vmatpush.bf16.msra.mxu0 %v164
  %184 = vmatpush.bf16.msra.mxu0 %v163
  %185 = vmatpush.bf16.msra.mxu0 %v162
  %186 = vmatmul.bf16.gmra.mxu0 %v109
  %v187 = vpop.f32.mrf.mxu0
  %v188 = vadd.f32 %v128, %v187
  %v189 = vpop.f32.mrf.mxu0
  %190 = vdwg.mxu0
  %v191 = vmax.f32 %v188, 0.0
  %v192 = vpack.c.bf16 %v191, %v191
  %v193 = vld [vmem:[%s5] sm:$0xf]
  %v194 = vld [vmem:[%s5 + $0x4] sm:$0xf]
  %v195 = vld [vmem:[%s5 + $0x8] sm:$0xf]
  %v196 = vld [vmem:[%s5 + $0xc] sm:$0xf]
  %v197 = vld [vmem:[%s5 + $0x10] sm:$0xf]
  %v198 = vld [vmem:[%s5 + $0x14] sm:$0xf]
  %v199 = vld [vmem:[%s5 + $0x18] sm:$0xf]
  %v200 = vld [vmem:[%s5 + $0x1c] sm:$0xf]
  %v201 = vld [vmem:[%s5 + $0x20] sm:$0xf]
  %v202 = vld [vmem:[%s5 + $0x24] sm:$0xf]
  %v203 = vld [vmem:[%s5 + $0x28] sm:$0xf]
  %v204 = vld [vmem:[%s5 + $0x2c] sm:$0xf]
  %v205 = vld [vmem:[%s5 + $0x30] sm:$0xf]
  %v206 = vld [vmem:[%s5 + $0x34] sm:$0xf]
  %v207 = vld [vmem:[%s5 + $0x38] sm:$0xf]
  %v208 = vld [vmem:[%s5 + $0x3c] sm:$0xf]
  %v209 = vld [vmem:[%s6] sm:$0x1]
  %v211 = vperm.slane %v209, 0
  %v229 = vunpack.c.l.b16 %v193
  %v230 = vunpack.c.l.b16 %v194
  %v231 = vunpack.c.l.b16 %v195
  %v232 = vunpack.c.l.b16 %v196
  %v233 = vunpack.c.l.b16 %v197
  %v234 = vunpack.c.l.b16 %v198
  %v235 = vunpack.c.l.b16 %v199
  %v236 = vunpack.c.l.b16 %v200
  %v237 = vunpack.c.l.b16 %v201
  %v238 = vunpack.c.l.b16 %v202
  %v239 = vunpack.c.l.b16 %v203
  %v240 = vunpack.c.l.b16 %v204
  %v241 = vunpack.c.l.b16 %v205
  %v242 = vunpack.c.l.b16 %v206
  %v243 = vunpack.c.l.b16 %v207
  %v244 = vunpack.c.l.b16 %v208
  %v245 = vpack.c.b16 %v230, %v229
  %v246 = vpack.c.b16 %v232, %v231
  %v247 = vpack.c.b16 %v234, %v233
  %v248 = vpack.c.b16 %v236, %v235
  %v249 = vpack.c.b16 %v238, %v237
  %v250 = vpack.c.b16 %v240, %v239
  %v251 = vpack.c.b16 %v242, %v241
  %v252 = vpack.c.b16 %v244, %v243
  %261 = vmatpush.bf16.msra.mxu0 %v252
  %262 = vmatpush.bf16.msra.mxu0 %v251
  %263 = vmatpush.bf16.msra.mxu0 %v250
  %264 = vmatpush.bf16.msra.mxu0 %v249
  %265 = vmatpush.bf16.msra.mxu0 %v248
  %266 = vmatpush.bf16.msra.mxu0 %v247
  %267 = vmatpush.bf16.msra.mxu0 %v246
  %268 = vmatpush.bf16.msra.mxu0 %v245
  %269 = vmatmul.bf16.gmra.mxu0 %v192
  %v270 = vpop.f32.mrf.mxu0
  %v271 = vadd.f32 %v211, %v270
  %v272 = vpop.f32.mrf.mxu0
  %273 = vdwg.mxu0
  %v274 = vxor.u32 %v271, 2147483648
  %v275 = vmul.f32 %v274, 1.442695
  %v276 = vpow.pop %v275
  %v277 = vadd.f32 %v276, 1.0
  %v278 = vrcp.pop %v277
  %v279 = vmul.f32 %v277, %v278
  %v280 = vsub.f32 1.0, %v279
  %v281 = vmul.f32 %v278, %v280
  %v282 = vadd.f32 %v278, %v281
  %vm283 = vweird.f32 %v277
  %vm284 = vweird.f32 %v278
  %vm285 = vmor %vm283, %vm284
  %v286 = vsel %vm285, %v278, %v282
  %v287 = vand.u32 2147483647, %v277
  %vm288 = vcmp.eq.f32.partialorder %v287, 8.507059e+37
  %v289 = vand.u32 %v277, 2147483648
  %v290 = vor.u32 1.1754944e-38, %v289
  %v291 = vsel %vm288, %v290, %v286
  %v292 = vmul.f32 1.0, %v291
  %293 = vst [vmem:[%s7] sm:$0xff] %v292
  // Predicated region
  $region30: #{mlp_cell_forward.1} parent=0 // pred_check
    _
  $region31: #{mlp_cell_forward.1} parent=0 // pred_check_branch
    %295 = sbr.rel (0) target = $region33
  $region32: #{mlp_cell_forward.1} parent=0 // pred_region
    _
  $region33: #{mlp_cell_forward.1} parent=0 // pred_fallthru
    _
  // Predicated region
  $region34: #{mlp_cell_forward.1} parent=0 // pred_check
    _
  $region35: #{mlp_cell_forward.1} parent=0 // pred_check_branch
    %297 = sbr.rel (0) target = $region37
  $region36: #{mlp_cell_forward.1} parent=0 // pred_region
    _
  $region37: #{mlp_cell_forward.1} parent=0 // pred_fallthru
    _

</llo_original>
